<compile_context>
chip_gen: v7x
topology: tpu7x:2x2x1
jax: 0.10.0
libtpu: 0.0.40
codegen_flags: <defaults>
</compile_context>

<pallas_src>
import functools

import jax
import jax.numpy as jnp
from jax.experimental import pallas as pl
from jax.experimental.pallas import tpu as pltpu


# ----------------------------------------------------------------------------
# helpers
# ----------------------------------------------------------------------------

def _pick_tile(dim, candidates):
    """Largest candidate that evenly divides `dim`, else the full dim."""
    for c in candidates:
        if dim % c == 0:
            return c
    return dim


# ----------------------------------------------------------------------------
# Pallas kernels
# ----------------------------------------------------------------------------

def _make_mm_kernel(act, fuse_ln, fuse_res):
    """Tiled matmul kernel.  Accumulates into the resident f32 output block.

    Optional fusions:
      fuse_ln : LayerNorm of the A tile (requires tk == K, f32 A input).
      fuse_res: residual add in the epilogue.
    Ref order: a, b, bias, [gamma, beta], [residual], out.
    """

    def kernel(*refs):
        it = iter(refs)
        a_ref = next(it)
        b_ref = next(it)
        bias_ref = next(it)
        g_ref = be_ref = r_ref = None
        if fuse_ln:
            g_ref = next(it)
            be_ref = next(it)
        if fuse_res:
            r_ref = next(it)
        o_ref = next(it)

        k = pl.program_id(2)

        a = a_ref[...]
        if fuse_ln:
            x = a.astype(jnp.float32)
            mu = jnp.mean(x, axis=-1, keepdims=True)
            var = jnp.mean((x - mu) * (x - mu), axis=-1, keepdims=True)
            xn = (x - mu) * jax.lax.rsqrt(var + 1e-5)
            a = (xn * g_ref[...] + be_ref[...]).astype(jnp.bfloat16)

        part = jnp.dot(a, b_ref[...], preferred_element_type=jnp.float32)

        @pl.when(k == 0)
        def _():
            o_ref[...] = jnp.zeros_like(o_ref)

        o_ref[...] += part

        @pl.when(k == pl.num_programs(2) - 1)
        def _():
            y = o_ref[...] + bias_ref[...]
            if act == "relu":
                y = jnp.maximum(y, 0.0)
            elif act == "quick_gelu":        # CLIP QuickGELU: x * sigmoid(1.702 x)
                y = y * jax.nn.sigmoid(1.702 * y)
            if fuse_res:
                y = y + r_ref[...]
            o_ref[...] = y

    return kernel


def pallas_matmul(a, b, bias=None, act=None, ln=None, residual=None):
    """y = act(LN?(a) @ b + bias) + residual?

    a:(M,K)  b:(K,N)  bias:(N,)  ln:(gamma,beta) each (K,)  residual:(M,N).
    MXU operands are bf16; accumulation and output are f32.
    """
    M, K = a.shape
    K2, N = b.shape
    assert K == K2
    fuse_ln = ln is not None
    fuse_res = residual is not None

    tm = _pick_tile(M, (256, 128, 64, 32, 16, 8))
    tn = _pick_tile(N, (256, 128))
    tk = K if fuse_ln else _pick_tile(K, (1024, 768, 512, 256, 128))

    if bias is None:
        bias = jnp.zeros((N,), jnp.float32)
    bias2 = bias.reshape(1, N).astype(jnp.float32)

    # Fused-LN path keeps A in f32 (LN math on VPU), casts to bf16 post-LN.
    a_in = a.astype(jnp.float32) if fuse_ln else a.astype(jnp.bfloat16)
    b_in = b.astype(jnp.bfloat16)

    operands = [a_in, b_in, bias2]
    in_specs = [
        pl.BlockSpec((tm, tk), lambda i, j, k: (i, k)),
        pl.BlockSpec((tk, tn), lambda i, j, k: (k, j)),
        pl.BlockSpec((1, tn), lambda i, j, k: (0, j)),
    ]
    if fuse_ln:
        g, be = ln
        operands += [g.reshape(1, K).astype(jnp.float32),
                     be.reshape(1, K).astype(jnp.float32)]
        in_specs += [pl.BlockSpec((1, K), lambda i, j, k: (0, 0)),
                     pl.BlockSpec((1, K), lambda i, j, k: (0, 0))]
    if fuse_res:
        operands.append(residual.astype(jnp.float32))
        in_specs.append(pl.BlockSpec((tm, tn), lambda i, j, k: (i, j)))

    kern = _make_mm_kernel(act, fuse_ln, fuse_res)
    return pl.pallas_call(
        kern,
        out_shape=jax.ShapeDtypeStruct((M, N), jnp.float32),
        grid_spec=pltpu.PrefetchScalarGridSpec(
            num_scalar_prefetch=0,
            grid=(M // tm, N // tn, K // tk),
            in_specs=in_specs,
            out_specs=pl.BlockSpec((tm, tn), lambda i, j, k: (i, j)),
        ),
        compiler_params=pltpu.CompilerParams(
            dimension_semantics=("parallel", "parallel", "arbitrary")),
    )(*operands)


def _ln_kernel(x_ref, g_ref, b_ref, o_ref):
    x = x_ref[...]
    mu = jnp.mean(x, axis=-1, keepdims=True)
    var = jnp.mean((x - mu) * (x - mu), axis=-1, keepdims=True)
    xn = (x - mu) * jax.lax.rsqrt(var + 1e-5)
    o_ref[...] = xn * g_ref[...] + b_ref[...]


def pallas_layernorm(x, g, b):
    M, D = x.shape
    tm = _pick_tile(M, (512, 256, 128, 64, 32, 16, 8))
    return pl.pallas_call(
        _ln_kernel,
        out_shape=jax.ShapeDtypeStruct((M, D), jnp.float32),
        grid_spec=pltpu.PrefetchScalarGridSpec(
            num_scalar_prefetch=0, grid=(M // tm,),
            in_specs=[pl.BlockSpec((tm, D), lambda i: (i, 0)),
                      pl.BlockSpec((1, D), lambda i: (0, 0)),
                      pl.BlockSpec((1, D), lambda i: (0, 0))],
            out_specs=pl.BlockSpec((tm, D), lambda i: (i, 0))),
        compiler_params=pltpu.CompilerParams(dimension_semantics=("parallel",)),
    )(x.astype(jnp.float32),
      g.reshape(1, D).astype(jnp.float32),
      b.reshape(1, D).astype(jnp.float32))


def _attn_kernel(q_ref, k_ref, v_ref, o_ref, *, scale):
    # scale (2^-k for head_dim=64) folded into q; exact in bf16.
    q = q_ref[...] * scale
    s = jnp.einsum('bqd,bkd->bqk', q, k_ref[...],
                   preferred_element_type=jnp.float32)
    m = jnp.max(s, axis=-1, keepdims=True)
    p = jnp.exp(s - m)
    l = jnp.sum(p, axis=-1, keepdims=True)
    p = p * pl.reciprocal(l, approx=True)
    o_ref[...] = jnp.einsum('bqk,bkd->bqd', p.astype(jnp.bfloat16), v_ref[...],
                            preferred_element_type=jnp.float32)


def pallas_attention(q, k, v, scale):
    BH, S, Dh = q.shape
    bh = _pick_tile(BH, (16, 8, 4, 2))
    kern = functools.partial(_attn_kernel, scale=scale)
    spec = lambda: pl.BlockSpec((bh, S, Dh), lambda i: (i, 0, 0))
    return pl.pallas_call(
        kern,
        out_shape=jax.ShapeDtypeStruct((BH, S, Dh), jnp.float32),
        grid_spec=pltpu.PrefetchScalarGridSpec(
            num_scalar_prefetch=0, grid=(BH // bh,),
            in_specs=[spec(), spec(), spec()],
            out_specs=spec()),
        compiler_params=pltpu.CompilerParams(dimension_semantics=("parallel",)),
    )(q.astype(jnp.bfloat16), k.astype(jnp.bfloat16), v.astype(jnp.bfloat16))


def _l2norm_kernel(x_ref, o_ref):
    x = x_ref[...]
    n = jnp.sqrt(jnp.sum(x * x, axis=-1, keepdims=True))
    o_ref[...] = x / jnp.maximum(n, 1e-12)   # matches F.normalize eps semantics


def pallas_l2_normalize(x):
    M, D = x.shape
    tm = _pick_tile(M, (512, 256, 128, 64, 32, 16, 8))
    return pl.pallas_call(
        _l2norm_kernel,
        out_shape=jax.ShapeDtypeStruct((M, D), jnp.float32),
        grid_spec=pltpu.PrefetchScalarGridSpec(
            num_scalar_prefetch=0, grid=(M // tm,),
            in_specs=[pl.BlockSpec((tm, D), lambda i: (i, 0))],
            out_specs=pl.BlockSpec((tm, D), lambda i: (i, 0))),
        compiler_params=pltpu.CompilerParams(dimension_semantics=("parallel",)),
    )(x.astype(jnp.float32))


def _moco_logits_kernel(q_ref, k_ref, queue_ref, pos_ref, neg_ref, *, inv_t):
    q = q_ref[...]                                    # (B, C) f32
    # 'nc,ck->nk' over a Kq tile of the queue (bf16 operands, f32 accumulate);
    # full-width lane-dense store.
    neg_ref[...] = jnp.dot(q.astype(jnp.bfloat16), queue_ref[...],
                           preferred_element_type=jnp.float32) * inv_t

    @pl.when(pl.program_id(0) == 0)
    def _():
        # 'nc,nc->n' in f32; broadcast into a lane-dense (B,128) slab.
        lp = jnp.sum(q * k_ref[...], axis=-1, keepdims=True) * inv_t
        pos_ref[...] = jnp.broadcast_to(lp, pos_ref.shape)


def pallas_moco_logits(q, k, queue, temperature):
    B, C = q.shape
    C2, Kq = queue.shape
    assert C == C2
    tkq = _pick_tile(Kq, (2048, 1024, 512, 256, 128))
    kern = functools.partial(_moco_logits_kernel, inv_t=1.0 / temperature)
    pos, neg = pl.pallas_call(
        kern,
        out_shape=(jax.ShapeDtypeStruct((B, 128), jnp.float32),
                   jax.ShapeDtypeStruct((B, Kq), jnp.float32)),
        grid_spec=pltpu.PrefetchScalarGridSpec(
            num_scalar_prefetch=0, grid=(Kq // tkq,),
            in_specs=[pl.BlockSpec((B, C), lambda j: (0, 0)),
                      pl.BlockSpec((B, C), lambda j: (0, 0)),
                      pl.BlockSpec((C, tkq), lambda j: (0, j))],
            out_specs=(pl.BlockSpec((B, 128), lambda j: (0, 0)),
                       pl.BlockSpec((B, tkq), lambda j: (0, j)))),
        compiler_params=pltpu.CompilerParams(dimension_semantics=("arbitrary",)),
    )(q.astype(jnp.float32), k.astype(jnp.float32), queue.astype(jnp.bfloat16))
    # column 0 stays l_pos so labels == 0 remain valid.
    return jnp.concatenate([pos[:, :1], neg], axis=1)


# ----------------------------------------------------------------------------
# Encoder (CLIP-ViT-style visual encoder + VLLIP_encoder MLP), built on kernels
# ----------------------------------------------------------------------------

VIT_WIDTH = 768
N_HEADS = 12
HEAD_DIM = 64
FEAT_DIM = 512
PATCH = 32


def init_encoder_params(key, num_patches):
    ks = jax.random.split(key, 12)
    D = VIT_WIDTH
    S = num_patches + 1

    def nrm(k, shape, std=0.02, dtype=jnp.bfloat16):
        # Matmul weights are stored in bf16 (MXU operands).
        return (std * jax.random.normal(k, shape)).astype(dtype)

    return {
        # Conv2d(9, 768, kernel=32, stride=32, bias=False) as an im2col matmul
        # weight laid out (C*kh*kw, 768) = (9216, 768)
        'conv1_w': nrm(ks[0], (9 * PATCH * PATCH, D), std=0.01),
        'class_emb': nrm(ks[1], (D,), dtype=jnp.float32),
        'pos_emb': nrm(ks[2], (S, D), dtype=jnp.float32),
        'ln_pre_g': jnp.ones((D,), jnp.float32),
        'ln_pre_b': jnp.zeros((D,), jnp.float32),
        'blk': {
            'ln1_g': jnp.ones((D,), jnp.float32),
            'ln1_b': jnp.zeros((D,), jnp.float32),
            'qkv_w': nrm(ks[3], (D, 3 * D)),
            'qkv_b': jnp.zeros((3 * D,), jnp.float32),
            'out_w': nrm(ks[4], (D, D)),
            'out_b': jnp.zeros((D,), jnp.float32),
            'ln2_g': jnp.ones((D,), jnp.float32),
            'ln2_b': jnp.zeros((D,), jnp.float32),
            'fc_w': nrm(ks[5], (D, 4 * D)),
            'fc_b': jnp.zeros((4 * D,), jnp.float32),
            'proj_w': nrm(ks[6], (4 * D, D)),
            'proj_b': jnp.zeros((D,), jnp.float32),
        },
        'ln_post_g': jnp.ones((D,), jnp.float32),
        'ln_post_b': jnp.zeros((D,), jnp.float32),
        'proj': nrm(ks[7], (D, FEAT_DIM)),
        # VLLIP_encoder.mlp = Linear(512, 512) + ReLU
        'mlp_w': nrm(ks[8], (FEAT_DIM, FEAT_DIM)),
        'mlp_b': jnp.zeros((FEAT_DIM,), jnp.float32),
    }


def transformer_block(p, x, B, S):
    """x is flattened (B*S, 768) f32 residual stream."""
    # ln1 fused into the QKV projection.
    qkv = pallas_matmul(x, p['qkv_w'], bias=p['qkv_b'],
                        ln=(p['ln1_g'], p['ln1_b']))                   # (B*S, 2304)
    # TODO(synk): head-major Q/K/V extraction via BlockSpec column windows is
    # blocked by HEAD_DIM=64 < 128-lane tiling; keep the XLA transpose glue.
    qkv = qkv.reshape(B, S, 3, N_HEADS, HEAD_DIM)
    qkv = qkv.transpose(2, 0, 3, 1, 4).reshape(3, B * N_HEADS, S, HEAD_DIM)
    q, k, v = qkv[0], qkv[1], qkv[2]
    o = pallas_attention(q, k, v, scale=HEAD_DIM ** -0.5)              # (B*H, S, Dh)
    o = o.reshape(B, N_HEADS, S, HEAD_DIM).transpose(0, 2, 1, 3)
    o = o.reshape(B * S, N_HEADS * HEAD_DIM)
    # output projection with fused residual add: x = x + o @ W_out + b_out
    x = pallas_matmul(o, p['out_w'], bias=p['out_b'], residual=x)
    # ln2 fused into the MLP up-projection (QuickGELU epilogue).
    h = pallas_matmul(x, p['fc_w'], bias=p['fc_b'], act='quick_gelu',
                      ln=(p['ln2_g'], p['ln2_b']))
    # MLP down-projection with fused residual add.
    x = pallas_matmul(h, p['proj_w'], bias=p['proj_b'], residual=x)
    return x


def encoder_forward(params, images):
    """VLLIP_encoder.forward: CLIP-visual-style encoder -> CLS token -> MLP+ReLU."""
    B, C, H, W = images.shape
    nh, nw = H // PATCH, W // PATCH
    nP = nh * nw
    # im2col: flatten each 32x32 patch in (C, kh, kw) order (matches Conv2d).
    patches = images.reshape(B, C, nh, PATCH, nw, PATCH)
    patches = patches.transpose(0, 2, 4, 1, 3, 5).reshape(B * nP, C * PATCH * PATCH)

    x = pallas_matmul(patches, params['conv1_w'])                     # (B*nP, 768)
    x = x.reshape(B, nP, VIT_WIDTH)
    cls = jnp.broadcast_to(params['class_emb'][None, None, :], (B, 1, VIT_WIDTH))
    x = jnp.concatenate([cls, x], axis=1)                             # (B, S, 768)
    x = x + params['pos_emb'][None]
    S = x.shape[1]

    x = x.reshape(B * S, VIT_WIDTH)
    x = pallas_layernorm(x, params['ln_pre_g'], params['ln_pre_b'])
    # TODO(synk): CLIP ViT-B/32 runs 12 transformer blocks; one block stands in here.
    x = transformer_block(params['blk'], x, B, S)
    # ln_post fused into the final feature projection.
    x = pallas_matmul(x, params['proj'],
                      ln=(params['ln_post_g'], params['ln_post_b']))  # (B*S, 512)
    tokens = x.reshape(B, S, FEAT_DIM)

    cls_tok = tokens[:, 0, :]                                         # x = x[:, 0, :]
    out = pallas_matmul(cls_tok, params['mlp_w'], bias=params['mlp_b'], act='relu')
    return out                                                        # (B, 512)


# ----------------------------------------------------------------------------
# VLLIP forward (MoCo logic)
# ----------------------------------------------------------------------------

def get_q_and_k_index_cluster(embeddings, cluster_num):
    # TODO(synk): Cluster_GPU is not defined in the source; approximated by a
    # single cosine-similarity assignment against the first `cluster_num` rows.
    B = embeddings.shape[0]
    centroids = embeddings[:cluster_num]
    sim = pallas_matmul(embeddings, centroids.T)        # (B, cluster_num)
    choice_cluster = jnp.argmax(sim, axis=1)            # cluster id per sample
    choice_points = jnp.argmax(sim, axis=0)             # representative per cluster
    q_index = jnp.arange(B)
    k_index = choice_points[choice_cluster]
    return q_index, k_index


def forward_vllip(params_q, params_k, queue, queue_ptr, img_q, img_k, *,
                  temperature, momentum, cluster_num,
                  multi_positive=False, soft_gamma=0.5):
    # query branch
    embeddings = encoder_forward(params_q, img_q)
    embeddings = pallas_l2_normalize(embeddings)
    index_q, index_k = get_q_and_k_index_cluster(embeddings, cluster_num)
    q = jnp.take(embeddings, index_q, axis=0)

    # key branch (no_grad in PyTorch; purely functional here).
    # Momentum update done in f32 then cast back to the stored param dtype.
    params_k = jax.tree_util.tree_map(
        lambda pk, pq: (momentum * pk.astype(jnp.float32)
                        + (1.0 - momentum) * pq.astype(jnp.float32)).astype(pk.dtype),
        params_k, params_q)
    k = encoder_forward(params_k, img_k)
    k = pallas_l2_normalize(k)
    k_ori = k
    k = jnp.take(k_ori, index_k, axis=0)
    if multi_positive:
        k = (k + k_ori) * soft_gamma

    # contrastive logits (l_pos / l_neg / cat / divide by T) in one tiled kernel
    logits = pallas_moco_logits(q, k, queue, temperature)
    labels = jnp.zeros((logits.shape[0],), dtype=jnp.int32)

    # dequeue and enqueue
    new_queue = jax.lax.dynamic_update_slice(queue, k.T, (0, queue_ptr))
    new_ptr = (queue_ptr + k.shape[0]) % queue.shape[1]

    return logits, labels, new_queue, new_ptr, params_k


# ----------------------------------------------------------------------------
# main
# ----------------------------------------------------------------------------

if __name__ == "__main__":
    key = jax.random.PRNGKey(0)
    B = 4
    IMG = 32            # one 32x32 patch per image -> sequence length 2 (CLS + 1)
    K_QUEUE = 256       # small stand-in for K=65536 (must divide by batch)
    T = 0.07
    M_MOM = 0.999
    CLUSTER_NUM = 2
    MULTI_POSITIVE = False
    SOFT_GAMMA = 0.5

    k_params, k_queue, kq_img, kk_img = jax.random.split(key, 4)

    num_patches = (IMG // PATCH) ** 2
    params_q = init_encoder_params(k_params, num_patches)
    # encoder_k initialized as an exact copy of encoder_q (as in __init__)
    params_k = jax.tree_util.tree_map(lambda x: x, params_q)

    queue = jax.random.normal(k_queue, (FEAT_DIM, K_QUEUE), jnp.float32)
    queue = queue / jnp.linalg.norm(queue, axis=0, keepdims=True)
    queue_ptr = 0

    img_q = jax.random.normal(kq_img, (B, 9, IMG, IMG), jnp.float32)
    img_k = jax.random.normal(kk_img, (B, 9, IMG, IMG), jnp.float32)

    logits, labels, new_queue, new_ptr, params_k = forward_vllip(
        params_q, params_k, queue, queue_ptr, img_q, img_k,
        temperature=T, momentum=M_MOM, cluster_num=CLUSTER_NUM,
        multi_positive=MULTI_POSITIVE, soft_gamma=SOFT_GAMMA)

    jax.block_until_ready(logits)
    jax.block_until_ready(new_queue)

    assert logits.shape == (B, 1 + K_QUEUE) and logits.dtype == jnp.float32
    assert labels.shape == (B,)
    assert new_queue.shape == (FEAT_DIM, K_QUEUE)
    print("KERNEL_OK")
</pallas_src>

<mosaic_0001>
module attributes {stable_mosaic.version = 11 : i64} {
  func.func @kernel(%arg0: i32, %arg1: i32, %arg2: i32, %arg3: memref<4x1024xbf16, #tpu.memory_space<vmem>>, %arg4: memref<1024x256xbf16, #tpu.memory_space<vmem>>, %arg5: memref<1x256xf32, #tpu.memory_space<vmem>>, %arg6: memref<4x256xf32, #tpu.memory_space<vmem>>) attributes {dimension_semantics = [#tpu.dimension_semantics<parallel>, #tpu.dimension_semantics<parallel>, #tpu.dimension_semantics<arbitrary>], iteration_bounds = array<i64: 1, 3, 9>, scalar_prefetch = 0 : i64, scratch_operands = 0 : i64, tpu.core_type = #tpu.core_type<tc>, window_params = [{transform_indices = @transform_0, window_bounds = array<i64: 4, 1024>}, {transform_indices = @transform_1, window_bounds = array<i64: 1024, 256>}, {transform_indices = @transform_2, window_bounds = array<i64: 1, 256>}, {transform_indices = @transform_3, window_bounds = array<i64: 4, 256>}]} {
    %c0 = arith.constant 0 : index
    %c0_0 = arith.constant 0 : index
    %0 = vector.load %arg3[%c0, %c0_0] : memref<4x1024xbf16, #tpu.memory_space<vmem>>, vector<4x1024xbf16>
    %c0_1 = arith.constant 0 : index
    %c0_2 = arith.constant 0 : index
    %1 = vector.load %arg4[%c0_1, %c0_2] : memref<1024x256xbf16, #tpu.memory_space<vmem>>, vector<1024x256xbf16>
    %cst = arith.constant dense<0.000000e+00> : vector<4x256xf32>
    %2 = tpu.matmul %0, %1, %cst {dimension_numbers = #tpu.dot_dimension_numbers<[1], [0], [0], [1], [0, 0, 1, 1], [], []>} : vector<4x1024xbf16>, vector<1024x256xbf16>, vector<4x256xf32> -> vector<4x256xf32>
    %c0_i32 = arith.constant 0 : i32
    %3 = arith.cmpi eq, %arg2, %c0_i32 : i32
    %4 = arith.extui %3 : i1 to i32
    %c0_i32_3 = arith.constant 0 : i32
    %5 = arith.cmpi ne, %4, %c0_i32_3 : i32
    scf.if %5 {
      %cst_9 = arith.constant 0.000000e+00 : f32
      %12 = vector.broadcast %cst_9 : f32 to vector<4x256xf32>
      %c0_10 = arith.constant 0 : index
      %c0_11 = arith.constant 0 : index
      %13 = vector.load %arg6[%c0_10, %c0_11] : memref<4x256xf32, #tpu.memory_space<vmem>>, vector<4x256xf32>
      tpu.vector_store %arg6[%c0_10, %c0_11], %12 {strides = array<i32>} : memref<4x256xf32, #tpu.memory_space<vmem>>, vector<4x256xf32>,
    } else {
    }
    %c0_4 = arith.constant 0 : index
    %c0_5 = arith.constant 0 : index
    %6 = vector.load %arg6[%c0_4, %c0_5] : memref<4x256xf32, #tpu.memory_space<vmem>>, vector<4x256xf32>
    %7 = arith.addf %6, %2 : vector<4x256xf32>
    %c0_6 = arith.constant 0 : index
    %c0_7 = arith.constant 0 : index
    %8 = vector.load %arg6[%c0_6, %c0_7] : memref<4x256xf32, #tpu.memory_space<vmem>>, vector<4x256xf32>
    tpu.vector_store %arg6[%c0_6, %c0_7], %7 {strides = array<i32>} : memref<4x256xf32, #tpu.memory_space<vmem>>, vector<4x256xf32>,
    %c8_i32 = arith.constant 8 : i32
    %9 = arith.cmpi eq, %arg2, %c8_i32 : i32
    %10 = arith.extui %9 : i1 to i32
    %c0_i32_8 = arith.constant 0 : i32
    %11 = arith.cmpi ne, %10, %c0_i32_8 : i32
    scf.if %11 {
      %c0_9 = arith.constant 0 : index
      %c0_10 = arith.constant 0 : index
      %12 = vector.load %arg6[%c0_9, %c0_10] : memref<4x256xf32, #tpu.memory_space<vmem>>, vector<4x256xf32>
      %c0_11 = arith.constant 0 : index
      %c0_12 = arith.constant 0 : index
      %13 = vector.load %arg5[%c0_11, %c0_12] : memref<1x256xf32, #tpu.memory_space<vmem>>, vector<1x256xf32>
      %14 = vector.broadcast %13 : vector<1x256xf32> to vector<4x256xf32>
      %15 = arith.addf %12, %14 : vector<4x256xf32>
      %c0_13 = arith.constant 0 : index
      %c0_14 = arith.constant 0 : index
      %16 = vector.load %arg6[%c0_13, %c0_14] : memref<4x256xf32, #tpu.memory_space<vmem>>, vector<4x256xf32>
      tpu.vector_store %arg6[%c0_13, %c0_14], %15 {strides = array<i32>} : memref<4x256xf32, #tpu.memory_space<vmem>>, vector<4x256xf32>,
    } else {
    }
    return
  }
  func.func @transform_0(%arg0: i32, %arg1: i32, %arg2: i32) -> (i32, i32) {
    %c0_i32 = arith.constant 0 : i32
    return %arg0, %arg2 : i32, i32
  }
  func.func @transform_1(%arg0: i32, %arg1: i32, %arg2: i32) -> (i32, i32) {
    %c0_i32 = arith.constant 0 : i32
    return %arg2, %arg1 : i32, i32
  }
  func.func @transform_2(%arg0: i32, %arg1: i32, %arg2: i32) -> (i32, i32) {
    %c0_i32 = arith.constant 0 : i32
    %c0_i32_0 = arith.constant 0 : i32
    return %c0_i32, %arg1 : i32, i32
  }
  func.func @transform_3(%arg0: i32, %arg1: i32, %arg2: i32) -> (i32, i32) {
    %c0_i32 = arith.constant 0 : i32
    return %arg0, %arg1 : i32, i32
  }
}

</mosaic_0001>

<llo_original>
// kernel: tpu_custom_call.1
$region0: #{tpu_custom_call.1}
  #allocation0 [shape = 'u32[]', space=smem, size = 0x4, offset = 0x4, fixed_abs, tag = 'smem constant byte address 0x4 - core index']
  #allocation1 [shape = 'u32[144,128]{1,0:T(1,128)}', space=vmem, size = 0x12000, scoped, tag = 'internal scratch']
  %s0 = inlined_call_operand.hbm [shape: bf16[4,9216], index: 0, kind: input, shape index: {}]
  %s1 = inlined_call_operand.hbm [shape: bf16[9216,768], index: 1, kind: input, shape index: {}]
  %s2 = inlined_call_operand.hbm [shape: f32[1,768], index: 2, kind: input, shape index: {}]
  %s3 = inlined_call_operand.hbm [shape: f32[4,768], index: 3, kind: output, shape index: {}]
  %s4 = sld [smem:[#allocation0]]
  $region65: #{tpu_custom_call.1} parent=0
    _
  %s6 = ssub.s32 1, %s4
  %s7 = scalar_select 0, %s6, %s4
  $region1: #{tpu_custom_call.1} parent=0
    #allocation2 [shape = 'u8[16384]{0}', space=vmem, size = 0x4000, scoped, tag = 'input window, operand 0']
    #allocation3 [shape = 's32[2]{0}', space=sflag, size = 0x8, scoped, tag = 'scoped memory for tpu_custom_call.1']
    #allocation4 [shape = 's32[2]{0}', space=sflag, size = 0x8, scoped, tag = 'scoped memory for tpu_custom_call.1']
    #allocation5 [shape = 'u8[1048576]{0}', space=vmem, size = 0x100000, scoped, tag = 'input window, operand 1']
    #allocation6 [shape = 's32[2]{0}', space=sflag, size = 0x8, scoped, tag = 'scoped memory for tpu_custom_call.1']
    #allocation7 [shape = 'u8[2048]{0}', space=vmem, size = 0x800, scoped, tag = 'input window, operand 2']
    #allocation8 [shape = 'u8[8192]{0}', space=vmem, size = 0x2000, scoped, tag = 'output window, operand 0']
    %8 = vsyncpa [#allocation3], 0
    %s9 = scalar_lea.sflag [#allocation3], 1
    %10 = vsyncpa %s9, 0
    %11 = vsyncpa [#allocation6], 0
    %s12 = scalar_lea.sflag [#allocation6], 1
    %13 = vsyncpa %s12, 0
    %14 = vsyncpa [#allocation4], 0
    %s15 = scalar_lea.sflag [#allocation4], 1
    %16 = vsyncpa %s15, 0
    loop: start=0, step=1, limit=29
    $region2: #{tpu_custom_call.1} parent=1 // loop_pre_header
      _
    $region3: #{tpu_custom_call.1} parent=1 // loop_header
      %s18 = sphi 0, %s22
      %p19 = scmp.ge.s32.totalorder %s18, 29
      %s25 = sphi 0, %s44
      %s26 = sphi 0, %s40
      %s27 = sphi 0, %s36
      %s28 = sphi 0, %s25
      %s29 = sphi 0, %s26
      %s30 = sphi 0, %s27
      %s31 = sphi 0, %s28
      %s32 = sphi 0, %s29
      %s33 = sphi 0, %s30
      %s49 = sphi 0, %s51
      %s52 = sphi 0, %s49
      %s53 = sphi 0, %s52
      %s69 = sphi 0, %s53
      %s77 = sphi 0, %s79
      %s80 = sphi 0, %s77
      %s81 = sphi 0, %s80
      %s97 = sphi 0, %s81
      %s103 = sphi 0, %s105
      %s106 = sphi 0, %s103
      %s107 = sphi 0, %s106
      %s123 = sphi 0, %s107
      %s131 = sphi 0, %s133
      %s134 = sphi 0, %s131
      %s135 = sphi 0, %s134
      %s151 = sphi 0, %s135
    $region4: #{tpu_custom_call.1} parent=1 // loop_header_branch
      %21 = sbr.rel (%p19) target = $region8
    $region5: #{tpu_custom_call.1} parent=1 // loop_body
      %s23 = ssub.s32 %s18, 1
      %s24 = ssub.s32 %s18, 2
      %s34 = sadd.s32 1, %s27
      %p35 = scmp.ge.s32.totalorder %s34, 9
      %s36 = scalar_select %p35, 0, %s34
      %s37 = sadd.s32 1, %s26
      %s38 = scalar_select %p35, %s37, %s26
      %p39 = scmp.ge.s32.totalorder %s38, 3
      %s40 = scalar_select %p39, 0, %s38
      %s41 = sadd.s32 1, %s25
      %s42 = scalar_select %p39, %s41, %s25
      %p43 = scmp.ge.s32.totalorder %s42, 1
      %s44 = scalar_select %p43, 0, %s42
      %s45 = ssub.s32 %s25, %s44
      %s46 = ssub.s32 %s27, %s36
      %s47 = sor.u32 %s45, %s46
      %p48 = scmp.eq.s32.totalorder %s47, 0
      %s50 = sadd.s32 %s49, 1
      %s51 = scalar_select %p48, %s49, %s50
      %p54 = pneg %p48
      %p55 = scmp.eq.s32.totalorder %s18, 26
      %p56 = por %p54, %p55
      %p57 = scmp.ne.s32.totalorder %s49, %s52
      %p58 = scmp.eq.s32.totalorder %s18, 0
      %p59 = por %p57, %p58
      %p60 = scmp.ne.s32.totalorder %s49, %s52
      %p61 = scmp.eq.s32.totalorder %s23, 26
      %p62 = por %p60, %p61
      %p63 = scmp.ne.s32.totalorder %s52, %s53
      %p64 = scmp.eq.s32.totalorder %s23, 0
      %p65 = por %p63, %p64
      %p66 = scmp.ne.s32.totalorder %s52, %s53
      %p67 = scmp.eq.s32.totalorder %s24, 26
      %p68 = por %p66, %p67
      %p70 = scmp.ne.s32.totalorder %s53, %s69
      %p71 = scmp.eq.s32.totalorder %s24, 0
      %p72 = por %p70, %p71
      %s73 = ssub.s32 %s27, %s36
      %s74 = ssub.s32 %s26, %s40
      %s75 = sor.u32 %s73, %s74
      %p76 = scmp.eq.s32.totalorder %s75, 0
      %s78 = sadd.s32 %s77, 1
      %s79 = scalar_select %p76, %s77, %s78
      %p82 = pneg %p76
      %p83 = scmp.eq.s32.totalorder %s18, 26
      %p84 = por %p82, %p83
      %p85 = scmp.ne.s32.totalorder %s77, %s80
      %p86 = scmp.eq.s32.totalorder %s18, 0
      %p87 = por %p85, %p86
      %p88 = scmp.ne.s32.totalorder %s77, %s80
      %p89 = scmp.eq.s32.totalorder %s23, 26
      %p90 = por %p88, %p89
      %p91 = scmp.ne.s32.totalorder %s80, %s81
      %p92 = scmp.eq.s32.totalorder %s23, 0
      %p93 = por %p91, %p92
      %p94 = scmp.ne.s32.totalorder %s80, %s81
      %p95 = scmp.eq.s32.totalorder %s24, 26
      %p96 = por %p94, %p95
      %p98 = scmp.ne.s32.totalorder %s81, %s97
      %p99 = scmp.eq.s32.totalorder %s24, 0
      %p100 = por %p98, %p99
      %s101 = ssub.s32 %s26, %s40
      %p102 = scmp.eq.s32.totalorder %s101, 0
      %s104 = sadd.s32 %s103, 1
      %s105 = scalar_select %p102, %s103, %s104
      %p108 = pneg %p102
      %p109 = scmp.eq.s32.totalorder %s18, 26
      %p110 = por %p108, %p109
      %p111 = scmp.ne.s32.totalorder %s103, %s106
      %p112 = scmp.eq.s32.totalorder %s18, 0
      %p113 = por %p111, %p112
      %p114 = scmp.ne.s32.totalorder %s103, %s106
      %p115 = scmp.eq.s32.totalorder %s23, 26
      %p116 = por %p114, %p115
      %p117 = scmp.ne.s32.totalorder %s106, %s107
      %p118 = scmp.eq.s32.totalorder %s23, 0
      %p119 = por %p117, %p118
      %p120 = scmp.ne.s32.totalorder %s106, %s107
      %p121 = scmp.eq.s32.totalorder %s24, 26
      %p122 = por %p120, %p121
      %p124 = scmp.ne.s32.totalorder %s107, %s123
      %p125 = scmp.eq.s32.totalorder %s24, 0
      %p126 = por %p124, %p125
      %s127 = ssub.s32 %s25, %s44
      %s128 = ssub.s32 %s26, %s40
      %s129 = sor.u32 %s127, %s128
      %p130 = scmp.eq.s32.totalorder %s129, 0
      %s132 = sadd.s32 %s131, 1
      %s133 = scalar_select %p130, %s131, %s132
      %p136 = pneg %p130
      %p137 = scmp.eq.s32.totalorder %s18, 26
      %p138 = por %p136, %p137
      %p139 = scmp.ne.s32.totalorder %s131, %s134
      %p140 = scmp.eq.s32.totalorder %s18, 0
      %p141 = por %p139, %p140
      %p142 = scmp.ne.s32.totalorder %s131, %s134
      %p143 = scmp.eq.s32.totalorder %s23, 26
      %p144 = por %p142, %p143
      %p145 = scmp.ne.s32.totalorder %s134, %s135
      %p146 = scmp.eq.s32.totalorder %s23, 0
      %p147 = por %p145, %p146
      %p148 = scmp.ne.s32.totalorder %s134, %s135
      %p149 = scmp.eq.s32.totalorder %s24, 26
      %p150 = por %p148, %p149
      %p152 = scmp.ne.s32.totalorder %s135, %s151
      %p153 = scmp.eq.s32.totalorder %s24, 0
      %p154 = por %p152, %p153
      %p155 = scmp.le.s32.totalorder 1, %s18
      %p156 = scmp.lt.s32.totalorder %s18, 28
      %p157 = pnand %p155, %p156
      %p158 = pneg %p157
      // Predicated region
      $region9: #{tpu_custom_call.1} parent=5 // pred_check
        _
      $region10: #{tpu_custom_call.1} parent=5 // pred_check_branch
        %160 = sbr.rel (%p157) target = $region12
      $region11: #{tpu_custom_call.1} parent=5 // pred_region
        %s161 = ssub.s32 %s18, 1
      $region12: #{tpu_custom_call.1} parent=5 // pred_fallthru
        _
      %p162 = scmp.lt.s32.totalorder %s18, 27
      // Predicated region
      $region13: #{tpu_custom_call.1} parent=5 // pred_check
        %p163 = pneg %p162
      $region14: #{tpu_custom_call.1} parent=5 // pred_check_branch
        %165 = sbr.rel (%p163) target = $region16
      $region15: #{tpu_custom_call.1} parent=5 // pred_region
        // Predicated region
        $region17: #{tpu_custom_call.1} parent=15 // pred_check
          %p166 = pneg %p59
        $region18: #{tpu_custom_call.1} parent=15 // pred_check_branch
          %168 = sbr.rel (%p166) target = $region20
        $region19: #{tpu_custom_call.1} parent=15 // pred_region
          %s169 = sand.u32 %s49, 1
          %s170 = scalar_lea.sflag [#allocation3], %s169
          %s171 = sand.u32 %s49, 1
          %s172 = smul.addr %s171, 16
          %s173 = scalar_lea.vmem [#allocation2], %s172
          %s174 = smul.u32 8, %s27
          %s176 = ssub.s32 256, 256
          %177 = vsyncadd %s170, %s176
          %s178 = smul.addr %s25, 72
          %s179 = sadd.s32 %s174, %s178
          %s180 = smul.addr %s179, 32
          %s181 = scalar_lea.hbm %s0, %s180
          %s183 = sshll.u32 %s173, 4
          %s184 = int_to_ptr.vmem [resolvable:$true] %s183
          %186 = dma.hbm_to_vmem [thread:$0]  %s181, 256, %s184, %s170
        $region20: #{tpu_custom_call.1} parent=15 // pred_fallthru
          _
        // Predicated region
        $region21: #{tpu_custom_call.1} parent=15 // pred_check
          %p187 = pneg %p87
        $region22: #{tpu_custom_call.1} parent=15 // pred_check_branch
          %189 = sbr.rel (%p187) target = $region24
        $region23: #{tpu_custom_call.1} parent=15 // pred_region
          %s190 = sand.u32 %s18, 1
          %s191 = scalar_lea.sflag [#allocation6], %s190
          %s192 = sand.u32 %s77, 1
          %s193 = smul.addr %s192, 1024
          %s194 = scalar_lea.vmem [#allocation5], %s193
          %s195 = smul.u32 128, %s27
          %s196 = smul.u32 2, %s26
          %s198 = ssub.s32 16384, 16384
          %199 = vsyncadd %s191, %s198
          %s200 = smul.addr %s195, 6
          %s201 = sadd.s32 %s196, %s200
          %s202 = smul.addr %s201, 64
          %s203 = scalar_lea.hbm %s1, %s202
          %s204 = sshll.u32 %s194, 4
          %s205 = int_to_ptr.vmem [resolvable:$true] %s204
          %210 = dma.hbm_to_vmem [thread:$0]  %s203, 16384, %s205, %s191, 384, 128, 8
        $region24: #{tpu_custom_call.1} parent=15 // pred_fallthru
          _
        // Predicated region
        $region25: #{tpu_custom_call.1} parent=15 // pred_check
          %p211 = pneg %p113
        $region26: #{tpu_custom_call.1} parent=15 // pred_check_branch
          %213 = sbr.rel (%p211) target = $region28
        $region27: #{tpu_custom_call.1} parent=15 // pred_region
          %s214 = sand.u32 %s18, 1
          %s215 = scalar_lea.sflag [#allocation6], %s214
          %s216 = sand.u32 %s103, 1
          %s217 = smul.addr %s216, 2
          %s218 = scalar_lea.vmem [#allocation7], %s217
          %s219 = smul.u32 2, %s26
          %s221 = ssub.s32 32, 32
          %222 = vsyncadd %s215, %s221
          %s223 = smul.addr %s219, 16
          %s224 = scalar_lea.hbm %s2, %s223
          %s226 = sshll.u32 %s218, 4
          %s227 = int_to_ptr.vmem [resolvable:$true] %s226
          %229 = dma.hbm_to_vmem [thread:$0]  %s224, 32, %s227, %s215
        $region28: #{tpu_custom_call.1} parent=15 // pred_fallthru
          _
      $region16: #{tpu_custom_call.1} parent=5 // pred_fallthru
        _
      %p230 = scmp.le.s32.totalorder 1, %s18
      %p231 = scmp.lt.s32.totalorder %s18, 28
      %p232 = pnand %p230, %p231
      %p233 = pneg %p232
      // Predicated region
      $region29: #{tpu_custom_call.1} parent=5 // pred_check
        _
      $region30: #{tpu_custom_call.1} parent=5 // pred_check_branch
        %235 = sbr.rel (%p232) target = $region32
      $region31: #{tpu_custom_call.1} parent=5 // pred_region
        %s236 = ssub.s32 %s18, 1
        %s237 = sand.u32 %s52, 1
        %s238 = scalar_lea.sflag [#allocation3], %s237
        %s239 = sand.u32 %s52, 1
        %s240 = smul.addr %s239, 16
        %s241 = scalar_lea.vmem [#allocation2], %s240
        // Predicated region
        $region33: #{tpu_custom_call.1} parent=31 // pred_check
          %p242 = pneg %p65
        $region34: #{tpu_custom_call.1} parent=31 // pred_check_branch
          %244 = sbr.rel (%p242) target = $region36
        $region35: #{tpu_custom_call.1} parent=31 // pred_region
          %245 = dma.done %s238, 256
        $region36: #{tpu_custom_call.1} parent=31 // pred_fallthru
          _
        %s246 = sand.u32 %s23, 1
        %s247 = scalar_lea.sflag [#allocation6], %s246
        %s248 = sand.u32 %s80, 1
        %s249 = smul.addr %s248, 1024
        %s250 = scalar_lea.vmem [#allocation5], %s249
        // Predicated region
        $region37: #{tpu_custom_call.1} parent=31 // pred_check
          %p251 = pneg %p93
        $region38: #{tpu_custom_call.1} parent=31 // pred_check_branch
          %253 = sbr.rel (%p251) target = $region40
        $region39: #{tpu_custom_call.1} parent=31 // pred_region
          %254 = dma.done %s247, 16384
        $region40: #{tpu_custom_call.1} parent=31 // pred_fallthru
          _
        %s255 = sand.u32 %s23, 1
        %s256 = scalar_lea.sflag [#allocation6], %s255
        %s257 = sand.u32 %s106, 1
        %s258 = smul.addr %s257, 2
        %s259 = scalar_lea.vmem [#allocation7], %s258
        // Predicated region
        $region41: #{tpu_custom_call.1} parent=31 // pred_check
          %p260 = pneg %p119
        $region42: #{tpu_custom_call.1} parent=31 // pred_check_branch
          %262 = sbr.rel (%p260) target = $region44
        $region43: #{tpu_custom_call.1} parent=31 // pred_region
          %263 = dma.done %s256, 32
        $region44: #{tpu_custom_call.1} parent=31 // pred_fallthru
          _
        %s264 = sand.u32 %s52, 1
        %s265 = scalar_lea.sflag [#allocation3], %s264
        %s266 = sand.u32 %s52, 1
        %s267 = smul.addr %s266, 16
        %s268 = scalar_lea.vmem [#allocation2], %s267
        %p269 = pneg %p65
        %p270 = pneg %p62
        %s271 = sand.u32 %s23, 1
        %s272 = scalar_lea.sflag [#allocation6], %s271
        %s273 = sand.u32 %s80, 1
        %s274 = smul.addr %s273, 1024
        %s275 = scalar_lea.vmem [#allocation5], %s274
        %p276 = pneg %p93
        %p277 = pneg %p90
        %s278 = sand.u32 %s23, 1
        %s279 = scalar_lea.sflag [#allocation6], %s278
        %s280 = sand.u32 %s106, 1
        %s281 = smul.addr %s280, 2
        %s282 = scalar_lea.vmem [#allocation7], %s281
        %p283 = pneg %p119
        %p284 = pneg %p116
        %p285 = pneg %p147
        %p286 = pneg %p144
        %s287 = sand.u32 %s134, 1
        %s288 = scalar_lea.sflag [#allocation4], %s287
        %s289 = sand.u32 %s134, 1
        %s290 = smul.addr %s289, 8
        %s291 = scalar_lea.vmem [#allocation8], %s290
        %s292 = smul.u32 8, %s30
        %s293 = smul.u32 128, %s30
        %s294 = smul.u32 2, %s29
        %s295 = smul.u32 2, %s29
        %s296 = smul.u32 2, %s29
        %v297 = vld [vmem:[%s241] sm:$0xff]
        %v298 = vld [vmem:[%s241 + $0x8] sm:$0xff]
        %v299 = vld [vmem:[%s250] sm:$0xff]
        %v300 = vld [vmem:[%s250 + $0x8] sm:$0xff]
        %v301 = vld [vmem:[%s250 + $0x10] sm:$0xff]
        %v302 = vld [vmem:[%s250 + $0x18] sm:$0xff]
        %v303 = vld [vmem:[%s250 + $0x20] sm:$0xff]
        %v304 = vld [vmem:[%s250 + $0x28] sm:$0xff]
        %v305 = vld [vmem:[%s250 + $0x30] sm:$0xff]
        %v306 = vld [vmem:[%s250 + $0x38] sm:$0xff]
        %v307 = vld [vmem:[%s250 + $0x40] sm:$0xff]
        %v308 = vld [vmem:[%s250 + $0x48] sm:$0xff]
        %v309 = vld [vmem:[%s250 + $0x50] sm:$0xff]
        %v310 = vld [vmem:[%s250 + $0x58] sm:$0xff]
        %v311 = vld [vmem:[%s250 + $0x60] sm:$0xff]
        %v312 = vld [vmem:[%s250 + $0x68] sm:$0xff]
        %v313 = vld [vmem:[%s250 + $0x70] sm:$0xff]
        %v314 = vld [vmem:[%s250 + $0x78] sm:$0xff]
        %v315 = vld [vmem:[%s250 + $0x80] sm:$0xff]
        %v316 = vld [vmem:[%s250 + $0x88] sm:$0xff]
        %v317 = vld [vmem:[%s250 + $0x90] sm:$0xff]
        %v318 = vld [vmem:[%s250 + $0x98] sm:$0xff]
        %v319 = vld [vmem:[%s250 + $0xa0] sm:$0xff]
        %v320 = vld [vmem:[%s250 + $0xa8] sm:$0xff]
        %v321 = vld [vmem:[%s250 + $0xb0] sm:$0xff]
        %v322 = vld [vmem:[%s250 + $0xb8] sm:$0xff]
        %v323 = vld [vmem:[%s250 + $0xc0] sm:$0xff]
        %v324 = vld [vmem:[%s250 + $0xc8] sm:$0xff]
        %v325 = vld [vmem:[%s250 + $0xd0] sm:$0xff]
        %v326 = vld [vmem:[%s250 + $0xd8] sm:$0xff]
        %v327 = vld [vmem:[%s250 + $0xe0] sm:$0xff]
        %v328 = vld [vmem:[%s250 + $0xe8] sm:$0xff]
        %v329 = vld [vmem:[%s250 + $0xf0] sm:$0xff]
        %v330 = vld [vmem:[%s250 + $0xf8] sm:$0xff]
        %v331 = vld [vmem:[%s250 + $0x100] sm:$0xff]
        %v332 = vld [vmem:[%s250 + $0x108] sm:$0xff]
        %v333 = vld [vmem:[%s250 + $0x110] sm:$0xff]
        %v334 = vld [vmem:[%s250 + $0x118] sm:$0xff]
        %v335 = vld [vmem:[%s250 + $0x120] sm:$0xff]
        %v336 = vld [vmem:[%s250 + $0x128] sm:$0xff]
        %v337 = vld [vmem:[%s250 + $0x130] sm:$0xff]
        %v338 = vld [vmem:[%s250 + $0x138] sm:$0xff]
        %v339 = vld [vmem:[%s250 + $0x140] sm:$0xff]
        %v340 = vld [vmem:[%s250 + $0x148] sm:$0xff]
        %v341 = vld [vmem:[%s250 + $0x150] sm:$0xff]
        %v342 = vld [vmem:[%s250 + $0x158] sm:$0xff]
        %v343 = vld [vmem:[%s250 + $0x160] sm:$0xff]
        %v344 = vld [vmem:[%s250 + $0x168] sm:$0xff]
        %v345 = vld [vmem:[%s250 + $0x170] sm:$0xff]
        %v346 = vld [vmem:[%s250 + $0x178] sm:$0xff]
        %v347 = vld [vmem:[%s250 + $0x180] sm:$0xff]
        %v348 = vld [vmem:[%s250 + $0x188] sm:$0xff]
        %v349 = vld [vmem:[%s250 + $0x190] sm:$0xff]
        %v350 = vld [vmem:[%s250 + $0x198] sm:$0xff]
        %v351 = vld [vmem:[%s250 + $0x1a0] sm:$0xff]
        %v352 = vld [vmem:[%s250 + $0x1a8] sm:$0xff]
        %v353 = vld [vmem:[%s250 + $0x1b0] sm:$0xff]
        %v354 = vld [vmem:[%s250 + $0x1b8] sm:$0xff]
        %v355 = vld [vmem:[%s250 + $0x1c0] sm:$0xff]
        %v356 = vld [vmem:[%s250 + $0x1c8] sm:$0xff]
        %v357 = vld [vmem:[%s250 + $0x1d0] sm:$0xff]
        %v358 = vld [vmem:[%s250 + $0x1d8] sm:$0xff]
        %v359 = vld [vmem:[%s250 + $0x1e0] sm:$0xff]
        %v360 = vld [vmem:[%s250 + $0x1e8] sm:$0xff]
        %v361 = vld [vmem:[%s250 + $0x1f0] sm:$0xff]
        %v362 = vld [vmem:[%s250 + $0x1f8] sm:$0xff]
        %v363 = vld [vmem:[%s250 + $0x200] sm:$0xff]
        %v364 = vld [vmem:[%s250 + $0x208] sm:$0xff]
        %v365 = vld [vmem:[%s250 + $0x210] sm:$0xff]
        %v366 = vld [vmem:[%s250 + $0x218] sm:$0xff]
        %v367 = vld [vmem:[%s250 + $0x220] sm:$0xff]
        %v368 = vld [vmem:[%s250 + $0x228] sm:$0xff]
        %v369 = vld [vmem:[%s250 + $0x230] sm:$0xff]
        %v370 = vld [vmem:[%s250 + $0x238] sm:$0xff]
        %v371 = vld [vmem:[%s250 + $0x240] sm:$0xff]
        %v372 = vld [vmem:[%s250 + $0x248] sm:$0xff]
        %v373 = vld [vmem:[%s250 + $0x250] sm:$0xff]
        %v374 = vld [vmem:[%s250 + $0x258] sm:$0xff]
        %v375 = vld [vmem:[%s250 + $0x260] sm:$0xff]
        %v376 = vld [vmem:[%s250 + $0x268] sm:$0xff]
        %v377 = vld [vmem:[%s250 + $0x270] sm:$0xff]
        %v378 = vld [vmem:[%s250 + $0x278] sm:$0xff]
        %v379 = vld [vmem:[%s250 + $0x280] sm:$0xff]
        %v380 = vld [vmem:[%s250 + $0x288] sm:$0xff]
        %v381 = vld [vmem:[%s250 + $0x290] sm:$0xff]
        %v382 = vld [vmem:[%s250 + $0x298] sm:$0xff]
        %v383 = vld [vmem:[%s250 + $0x2a0] sm:$0xff]
        %v384 = vld [vmem:[%s250 + $0x2a8] sm:$0xff]
        %v385 = vld [vmem:[%s250 + $0x2b0] sm:$0xff]
        %v386 = vld [vmem:[%s250 + $0x2b8] sm:$0xff]
        %v387 = vld [vmem:[%s250 + $0x2c0] sm:$0xff]
        %v388 = vld [vmem:[%s250 + $0x2c8] sm:$0xff]
        %v389 = vld [vmem:[%s250 + $0x2d0] sm:$0xff]
        %v390 = vld [vmem:[%s250 + $0x2d8] sm:$0xff]
        %v391 = vld [vmem:[%s250 + $0x2e0] sm:$0xff]
        %v392 = vld [vmem:[%s250 + $0x2e8] sm:$0xff]
        %v393 = vld [vmem:[%s250 + $0x2f0] sm:$0xff]
        %v394 = vld [vmem:[%s250 + $0x2f8] sm:$0xff]
        %v395 = vld [vmem:[%s250 + $0x300] sm:$0xff]
        %v396 = vld [vmem:[%s250 + $0x308] sm:$0xff]
        %v397 = vld [vmem:[%s250 + $0x310] sm:$0xff]
        %v398 = vld [vmem:[%s250 + $0x318] sm:$0xff]
        %v399 = vld [vmem:[%s250 + $0x320] sm:$0xff]
        %v400 = vld [vmem:[%s250 + $0x328] sm:$0xff]
        %v401 = vld [vmem:[%s250 + $0x330] sm:$0xff]
        %v402 = vld [vmem:[%s250 + $0x338] sm:$0xff]
        %v403 = vld [vmem:[%s250 + $0x340] sm:$0xff]
        %v404 = vld [vmem:[%s250 + $0x348] sm:$0xff]
        %v405 = vld [vmem:[%s250 + $0x350] sm:$0xff]
        %v406 = vld [vmem:[%s250 + $0x358] sm:$0xff]
        %v407 = vld [vmem:[%s250 + $0x360] sm:$0xff]
        %v408 = vld [vmem:[%s250 + $0x368] sm:$0xff]
        %v409 = vld [vmem:[%s250 + $0x370] sm:$0xff]
        %v410 = vld [vmem:[%s250 + $0x378] sm:$0xff]
        %v411 = vld [vmem:[%s250 + $0x380] sm:$0xff]
        %v412 = vld [vmem:[%s250 + $0x388] sm:$0xff]
        %v413 = vld [vmem:[%s250 + $0x390] sm:$0xff]
        %v414 = vld [vmem:[%s250 + $0x398] sm:$0xff]
        %v415 = vld [vmem:[%s250 + $0x3a0] sm:$0xff]
        %v416 = vld [vmem:[%s250 + $0x3a8] sm:$0xff]
        %v417 = vld [vmem:[%s250 + $0x3b0] sm:$0xff]
        %v418 = vld [vmem:[%s250 + $0x3b8] sm:$0xff]
        %v419 = vld [vmem:[%s250 + $0x3c0] sm:$0xff]
        %v420 = vld [vmem:[%s250 + $0x3c8] sm:$0xff]
        %v421 = vld [vmem:[%s250 + $0x3d0] sm:$0xff]
        %v422 = vld [vmem:[%s250 + $0x3d8] sm:$0xff]
        %v423 = vld [vmem:[%s250 + $0x3e0] sm:$0xff]
        %v424 = vld [vmem:[%s250 + $0x3e8] sm:$0xff]
        %v425 = vld [vmem:[%s250 + $0x3f0] sm:$0xff]
        %v426 = vld [vmem:[%s250 + $0x3f8] sm:$0xff]
        %v429 = vcombine.high %v297, %v297
        %v431 = vunpack.c.l.s4 1983009808
        %v432 = vunpack.c.0.s8 %v431
        %v433 = vlaneseq
        %v434 = vshrl.u32 %v433, 7
        %v435 = vsub.s32 %v432, %v434
        %v436 = vrot.slane %v297, %v435
        %v438 = vunpack.c.l.s4 1983009808
        %v439 = vunpack.c.0.s8 %v438
        %v440 = vlaneseq
        %v441 = vshrl.u32 %v440, 7
        %v442 = vsub.s32 %v439, %v441
        %v443 = vrot.slane %v429, %v442
        %v444 = vcombine.high %v436, %v436
        %v445 = vcombine.high %v443, %v443
        %v446 = vcombine.high %v298, %v298
        %v448 = vunpack.c.l.s4 1983009808
        %v449 = vunpack.c.0.s8 %v448
        %v450 = vlaneseq
        %v451 = vshrl.u32 %v450, 7
        %v452 = vsub.s32 %v449, %v451
        %v453 = vrot.slane %v298, %v452
        %v455 = vunpack.c.l.s4 1983009808
        %v456 = vunpack.c.0.s8 %v455
        %v457 = vlaneseq
        %v458 = vshrl.u32 %v457, 7
        %v459 = vsub.s32 %v456, %v458
        %v460 = vrot.slane %v446, %v459
        %v461 = vcombine.high %v453, %v453
        %v462 = vcombine.high %v460, %v460
        %v599 = vunpack.c.l.b16 %v299
        %v600 = vunpack.c.h.b16 %v299
        %v601 = vunpack.c.l.b16 %v300
        %v602 = vunpack.c.h.b16 %v300
        %v603 = vunpack.c.l.b16 %v301
        %v604 = vunpack.c.h.b16 %v301
        %v605 = vunpack.c.l.b16 %v302
        %v606 = vunpack.c.h.b16 %v302
        %v607 = vunpack.c.l.b16 %v303
        %v608 = vunpack.c.h.b16 %v303
        %v609 = vunpack.c.l.b16 %v304
        %v610 = vunpack.c.h.b16 %v304
        %v611 = vunpack.c.l.b16 %v305
        %v612 = vunpack.c.h.b16 %v305
        %v613 = vunpack.c.l.b16 %v306
        %v614 = vunpack.c.h.b16 %v306
        %v615 = vunpack.c.l.b16 %v307
        %v616 = vunpack.c.h.b16 %v307
        %v617 = vunpack.c.l.b16 %v308
        %v618 = vunpack.c.h.b16 %v308
        %v619 = vunpack.c.l.b16 %v309
        %v620 = vunpack.c.h.b16 %v309
        %v621 = vunpack.c.l.b16 %v310
        %v622 = vunpack.c.h.b16 %v310
        %v623 = vunpack.c.l.b16 %v311
        %v624 = vunpack.c.h.b16 %v311
        %v625 = vunpack.c.l.b16 %v312
        %v626 = vunpack.c.h.b16 %v312
        %v627 = vunpack.c.l.b16 %v313
        %v628 = vunpack.c.h.b16 %v313
        %v629 = vunpack.c.l.b16 %v314
        %v630 = vunpack.c.h.b16 %v314
        %v631 = vunpack.c.l.b16 %v315
        %v632 = vunpack.c.h.b16 %v315
        %v633 = vunpack.c.l.b16 %v316
        %v634 = vunpack.c.h.b16 %v316
        %v635 = vunpack.c.l.b16 %v317
        %v636 = vunpack.c.h.b16 %v317
        %v637 = vunpack.c.l.b16 %v318
        %v638 = vunpack.c.h.b16 %v318
        %v639 = vunpack.c.l.b16 %v319
        %v640 = vunpack.c.h.b16 %v319
        %v641 = vunpack.c.l.b16 %v320
        %v642 = vunpack.c.h.b16 %v320
        %v643 = vunpack.c.l.b16 %v321
        %v644 = vunpack.c.h.b16 %v321
        %v645 = vunpack.c.l.b16 %v322
        %v646 = vunpack.c.h.b16 %v322
        %v647 = vunpack.c.l.b16 %v323
        %v648 = vunpack.c.h.b16 %v323
        %v649 = vunpack.c.l.b16 %v324
        %v650 = vunpack.c.h.b16 %v324
        %v651 = vunpack.c.l.b16 %v325
        %v652 = vunpack.c.h.b16 %v325
        %v653 = vunpack.c.l.b16 %v326
        %v654 = vunpack.c.h.b16 %v326
        %v655 = vunpack.c.l.b16 %v327
        %v656 = vunpack.c.h.b16 %v327
        %v657 = vunpack.c.l.b16 %v328
        %v658 = vunpack.c.h.b16 %v328
        %v659 = vunpack.c.l.b16 %v329
        %v660 = vunpack.c.h.b16 %v329
        %v661 = vunpack.c.l.b16 %v330
        %v662 = vunpack.c.h.b16 %v330
        %v663 = vunpack.c.l.b16 %v331
        %v664 = vunpack.c.h.b16 %v331
        %v665 = vunpack.c.l.b16 %v332
        %v666 = vunpack.c.h.b16 %v332
        %v667 = vunpack.c.l.b16 %v333
        %v668 = vunpack.c.h.b16 %v333
        %v669 = vunpack.c.l.b16 %v334
        %v670 = vunpack.c.h.b16 %v334
        %v671 = vunpack.c.l.b16 %v335
        %v672 = vunpack.c.h.b16 %v335
        %v673 = vunpack.c.l.b16 %v336
        %v674 = vunpack.c.h.b16 %v336
        %v675 = vunpack.c.l.b16 %v337
        %v676 = vunpack.c.h.b16 %v337
        %v677 = vunpack.c.l.b16 %v338
        %v678 = vunpack.c.h.b16 %v338
        %v679 = vunpack.c.l.b16 %v339
        %v680 = vunpack.c.h.b16 %v339
        %v681 = vunpack.c.l.b16 %v340
        %v682 = vunpack.c.h.b16 %v340
        %v683 = vunpack.c.l.b16 %v341
        %v684 = vunpack.c.h.b16 %v341
        %v685 = vunpack.c.l.b16 %v342
        %v686 = vunpack.c.h.b16 %v342
        %v687 = vunpack.c.l.b16 %v343
        %v688 = vunpack.c.h.b16 %v343
        %v689 = vunpack.c.l.b16 %v344
        %v690 = vunpack.c.h.b16 %v344
        %v691 = vunpack.c.l.b16 %v345
        %v692 = vunpack.c.h.b16 %v345
        %v693 = vunpack.c.l.b16 %v346
        %v694 = vunpack.c.h.b16 %v346
        %v695 = vunpack.c.l.b16 %v347
        %v696 = vunpack.c.h.b16 %v347
        %v697 = vunpack.c.l.b16 %v348
        %v698 = vunpack.c.h.b16 %v348
        %v699 = vunpack.c.l.b16 %v349
        %v700 = vunpack.c.h.b16 %v349
        %v701 = vunpack.c.l.b16 %v350
        %v702 = vunpack.c.h.b16 %v350
        %v703 = vunpack.c.l.b16 %v351
        %v704 = vunpack.c.h.b16 %v351
        %v705 = vunpack.c.l.b16 %v352
        %v706 = vunpack.c.h.b16 %v352
        %v707 = vunpack.c.l.b16 %v353
        %v708 = vunpack.c.h.b16 %v353
        %v709 = vunpack.c.l.b16 %v354
        %v710 = vunpack.c.h.b16 %v354
        %v711 = vunpack.c.l.b16 %v355
        %v712 = vunpack.c.h.b16 %v355
        %v713 = vunpack.c.l.b16 %v356
        %v714 = vunpack.c.h.b16 %v356
        %v715 = vunpack.c.l.b16 %v357
        %v716 = vunpack.c.h.b16 %v357
        %v717 = vunpack.c.l.b16 %v358
        %v718 = vunpack.c.h.b16 %v358
        %v719 = vunpack.c.l.b16 %v359
        %v720 = vunpack.c.h.b16 %v359
        %v721 = vunpack.c.l.b16 %v360
        %v722 = vunpack.c.h.b16 %v360
        %v723 = vunpack.c.l.b16 %v361
        %v724 = vunpack.c.h.b16 %v361
        %v725 = vunpack.c.l.b16 %v362
        %v726 = vunpack.c.h.b16 %v362
        %v727 = vunpack.c.l.b16 %v363
        %v728 = vunpack.c.h.b16 %v363
        %v729 = vunpack.c.l.b16 %v364
        %v730 = vunpack.c.h.b16 %v364
        %v731 = vunpack.c.l.b16 %v365
        %v732 = vunpack.c.h.b16 %v365
        %v733 = vunpack.c.l.b16 %v366
        %v734 = vunpack.c.h.b16 %v366
        %v735 = vunpack.c.l.b16 %v367
        %v736 = vunpack.c.h.b16 %v367
        %v737 = vunpack.c.l.b16 %v368
        %v738 = vunpack.c.h.b16 %v368
        %v739 = vunpack.c.l.b16 %v369
        %v740 = vunpack.c.h.b16 %v369
        %v741 = vunpack.c.l.b16 %v370
        %v742 = vunpack.c.h.b16 %v370
        %v743 = vunpack.c.l.b16 %v371
        %v744 = vunpack.c.h.b16 %v371
        %v745 = vunpack.c.l.b16 %v372
        %v746 = vunpack.c.h.b16 %v372
        %v747 = vunpack.c.l.b16 %v373
        %v748 = vunpack.c.h.b16 %v373
        %v749 = vunpack.c.l.b16 %v374
        %v750 = vunpack.c.h.b16 %v374
        %v751 = vunpack.c.l.b16 %v375
        %v752 = vunpack.c.h.b16 %v375
        %v753 = vunpack.c.l.b16 %v376
        %v754 = vunpack.c.h.b16 %v376
        %v755 = vunpack.c.l.b16 %v377
        %v756 = vunpack.c.h.b16 %v377
        %v757 = vunpack.c.l.b16 %v378
        %v758 = vunpack.c.h.b16 %v378
        %v759 = vunpack.c.l.b16 %v379
        %v760 = vunpack.c.h.b16 %v379
        %v761 = vunpack.c.l.b16 %v380
        %v762 = vunpack.c.h.b16 %v380
        %v763 = vunpack.c.l.b16 %v381
        %v764 = vunpack.c.h.b16 %v381
        %v765 = vunpack.c.l.b16 %v382
        %v766 = vunpack.c.h.b16 %v382
        %v767 = vunpack.c.l.b16 %v383
        %v768 = vunpack.c.h.b16 %v383
        %v769 = vunpack.c.l.b16 %v384
        %v770 = vunpack.c.h.b16 %v384
        %v771 = vunpack.c.l.b16 %v385
        %v772 = vunpack.c.h.b16 %v385
        %v773 = vunpack.c.l.b16 %v386
        %v774 = vunpack.c.h.b16 %v386
        %v775 = vunpack.c.l.b16 %v387
        %v776 = vunpack.c.h.b16 %v387
        %v777 = vunpack.c.l.b16 %v388
        %v778 = vunpack.c.h.b16 %v388
        %v779 = vunpack.c.l.b16 %v389
        %v780 = vunpack.c.h.b16 %v389
        %v781 = vunpack.c.l.b16 %v390
        %v782 = vunpack.c.h.b16 %v390
        %v783 = vunpack.c.l.b16 %v391
        %v784 = vunpack.c.h.b16 %v391
        %v785 = vunpack.c.l.b16 %v392
        %v786 = vunpack.c.h.b16 %v392
        %v787 = vunpack.c.l.b16 %v393
        %v788 = vunpack.c.h.b16 %v393
        %v789 = vunpack.c.l.b16 %v394
        %v790 = vunpack.c.h.b16 %v394
        %v791 = vunpack.c.l.b16 %v395
        %v792 = vunpack.c.h.b16 %v395
        %v793 = vunpack.c.l.b16 %v396
        %v794 = vunpack.c.h.b16 %v396
        %v795 = vunpack.c.l.b16 %v397
        %v796 = vunpack.c.h.b16 %v397
        %v797 = vunpack.c.l.b16 %v398
        %v798 = vunpack.c.h.b16 %v398
        %v799 = vunpack.c.l.b16 %v399
        %v800 = vunpack.c.h.b16 %v399
        %v801 = vunpack.c.l.b16 %v400
        %v802 = vunpack.c.h.b16 %v400
        %v803 = vunpack.c.l.b16 %v401
        %v804 = vunpack.c.h.b16 %v401
        %v805 = vunpack.c.l.b16 %v402
        %v806 = vunpack.c.h.b16 %v402
        %v807 = vunpack.c.l.b16 %v403
        %v808 = vunpack.c.h.b16 %v403
        %v809 = vunpack.c.l.b16 %v404
        %v810 = vunpack.c.h.b16 %v404
        %v811 = vunpack.c.l.b16 %v405
        %v812 = vunpack.c.h.b16 %v405
        %v813 = vunpack.c.l.b16 %v406
        %v814 = vunpack.c.h.b16 %v406
        %v815 = vunpack.c.l.b16 %v407
        %v816 = vunpack.c.h.b16 %v407
        %v817 = vunpack.c.l.b16 %v408
        %v818 = vunpack.c.h.b16 %v408
        %v819 = vunpack.c.l.b16 %v409
        %v820 = vunpack.c.h.b16 %v409
        %v821 = vunpack.c.l.b16 %v410
        %v822 = vunpack.c.h.b16 %v410
        %v823 = vunpack.c.l.b16 %v411
        %v824 = vunpack.c.h.b16 %v411
        %v825 = vunpack.c.l.b16 %v412
        %v826 = vunpack.c.h.b16 %v412
        %v827 = vunpack.c.l.b16 %v413
        %v828 = vunpack.c.h.b16 %v413
        %v829 = vunpack.c.l.b16 %v414
        %v830 = vunpack.c.h.b16 %v414
        %v831 = vunpack.c.l.b16 %v415
        %v832 = vunpack.c.h.b16 %v415
        %v833 = vunpack.c.l.b16 %v416
        %v834 = vunpack.c.h.b16 %v416
        %v835 = vunpack.c.l.b16 %v417
        %v836 = vunpack.c.h.b16 %v417
        %v837 = vunpack.c.l.b16 %v418
        %v838 = vunpack.c.h.b16 %v418
        %v839 = vunpack.c.l.b16 %v419
        %v840 = vunpack.c.h.b16 %v419
        %v841 = vunpack.c.l.b16 %v420
        %v842 = vunpack.c.h.b16 %v420
        %v843 = vunpack.c.l.b16 %v421
        %v844 = vunpack.c.h.b16 %v421
        %v845 = vunpack.c.l.b16 %v422
        %v846 = vunpack.c.h.b16 %v422
        %v847 = vunpack.c.l.b16 %v423
        %v848 = vunpack.c.h.b16 %v423
        %v849 = vunpack.c.l.b16 %v424
        %v850 = vunpack.c.h.b16 %v424
        %v851 = vunpack.c.l.b16 %v425
        %v852 = vunpack.c.h.b16 %v425
        %v853 = vunpack.c.l.b16 %v426
        %v854 = vunpack.c.h.b16 %v426
        %v855 = vpack.c.b16 %v601, %v599
        %v856 = vpack.c.b16 %v602, %v600
        %v857 = vpack.c.b16 %v605, %v603
        %v858 = vpack.c.b16 %v606, %v604
        %v859 = vpack.c.b16 %v609, %v607
        %v860 = vpack.c.b16 %v610, %v608
        %v861 = vpack.c.b16 %v613, %v611
        %v862 = vpack.c.b16 %v614, %v612
        %v863 = vpack.c.b16 %v617, %v615
        %v864 = vpack.c.b16 %v618, %v616
        %v865 = vpack.c.b16 %v621, %v619
        %v866 = vpack.c.b16 %v622, %v620
        %v867 = vpack.c.b16 %v625, %v623
        %v868 = vpack.c.b16 %v626, %v624
        %v869 = vpack.c.b16 %v629, %v627
        %v870 = vpack.c.b16 %v630, %v628
        %v871 = vpack.c.b16 %v633, %v631
        %v872 = vpack.c.b16 %v634, %v632
        %v873 = vpack.c.b16 %v637, %v635
        %v874 = vpack.c.b16 %v638, %v636
        %v875 = vpack.c.b16 %v641, %v639
        %v876 = vpack.c.b16 %v642, %v640
        %v877 = vpack.c.b16 %v645, %v643
        %v878 = vpack.c.b16 %v646, %v644
        %v879 = vpack.c.b16 %v649, %v647
        %v880 = vpack.c.b16 %v650, %v648
        %v881 = vpack.c.b16 %v653, %v651
        %v882 = vpack.c.b16 %v654, %v652
        %v883 = vpack.c.b16 %v657, %v655
        %v884 = vpack.c.b16 %v658, %v656
        %v885 = vpack.c.b16 %v661, %v659
        %v886 = vpack.c.b16 %v662, %v660
        %v887 = vpack.c.b16 %v665, %v663
        %v888 = vpack.c.b16 %v666, %v664
        %v889 = vpack.c.b16 %v669, %v667
        %v890 = vpack.c.b16 %v670, %v668
        %v891 = vpack.c.b16 %v673, %v671
        %v892 = vpack.c.b16 %v674, %v672
        %v893 = vpack.c.b16 %v677, %v675
        %v894 = vpack.c.b16 %v678, %v676
        %v895 = vpack.c.b16 %v681, %v679
        %v896 = vpack.c.b16 %v682, %v680
        %v897 = vpack.c.b16 %v685, %v683
        %v898 = vpack.c.b16 %v686, %v684
        %v899 = vpack.c.b16 %v689, %v687
        %v900 = vpack.c.b16 %v690, %v688
        %v901 = vpack.c.b16 %v693, %v691
        %v902 = vpack.c.b16 %v694, %v692
        %v903 = vpack.c.b16 %v697, %v695
        %v904 = vpack.c.b16 %v698, %v696
        %v905 = vpack.c.b16 %v701, %v699
        %v906 = vpack.c.b16 %v702, %v700
        %v907 = vpack.c.b16 %v705, %v703
        %v908 = vpack.c.b16 %v706, %v704
        %v909 = vpack.c.b16 %v709, %v707
        %v910 = vpack.c.b16 %v710, %v708
        %v911 = vpack.c.b16 %v713, %v711
        %v912 = vpack.c.b16 %v714, %v712
        %v913 = vpack.c.b16 %v717, %v715
        %v914 = vpack.c.b16 %v718, %v716
        %v915 = vpack.c.b16 %v721, %v719
        %v916 = vpack.c.b16 %v722, %v720
        %v917 = vpack.c.b16 %v725, %v723
        %v918 = vpack.c.b16 %v726, %v724
        %v919 = vpack.c.b16 %v729, %v727
        %v920 = vpack.c.b16 %v730, %v728
        %v921 = vpack.c.b16 %v733, %v731
        %v922 = vpack.c.b16 %v734, %v732
        %v923 = vpack.c.b16 %v737, %v735
        %v924 = vpack.c.b16 %v738, %v736
        %v925 = vpack.c.b16 %v741, %v739
        %v926 = vpack.c.b16 %v742, %v740
        %v927 = vpack.c.b16 %v745, %v743
        %v928 = vpack.c.b16 %v746, %v744
        %v929 = vpack.c.b16 %v749, %v747
        %v930 = vpack.c.b16 %v750, %v748
        %v931 = vpack.c.b16 %v753, %v751
        %v932 = vpack.c.b16 %v754, %v752
        %v933 = vpack.c.b16 %v757, %v755
        %v934 = vpack.c.b16 %v758, %v756
        %v935 = vpack.c.b16 %v761, %v759
        %v936 = vpack.c.b16 %v762, %v760
        %v937 = vpack.c.b16 %v765, %v763
        %v938 = vpack.c.b16 %v766, %v764
        %v939 = vpack.c.b16 %v769, %v767
        %v940 = vpack.c.b16 %v770, %v768
        %v941 = vpack.c.b16 %v773, %v771
        %v942 = vpack.c.b16 %v774, %v772
        %v943 = vpack.c.b16 %v777, %v775
        %v944 = vpack.c.b16 %v778, %v776
        %v945 = vpack.c.b16 %v781, %v779
        %v946 = vpack.c.b16 %v782, %v780
        %v947 = vpack.c.b16 %v785, %v783
        %v948 = vpack.c.b16 %v786, %v784
        %v949 = vpack.c.b16 %v789, %v787
        %v950 = vpack.c.b16 %v790, %v788
        %v951 = vpack.c.b16 %v793, %v791
        %v952 = vpack.c.b16 %v794, %v792
        %v953 = vpack.c.b16 %v797, %v795
        %v954 = vpack.c.b16 %v798, %v796
        %v955 = vpack.c.b16 %v801, %v799
        %v956 = vpack.c.b16 %v802, %v800
        %v957 = vpack.c.b16 %v805, %v803
        %v958 = vpack.c.b16 %v806, %v804
        %v959 = vpack.c.b16 %v809, %v807
        %v960 = vpack.c.b16 %v810, %v808
        %v961 = vpack.c.b16 %v813, %v811
        %v962 = vpack.c.b16 %v814, %v812
        %v963 = vpack.c.b16 %v817, %v815
        %v964 = vpack.c.b16 %v818, %v816
        %v965 = vpack.c.b16 %v821, %v819
        %v966 = vpack.c.b16 %v822, %v820
        %v967 = vpack.c.b16 %v825, %v823
        %v968 = vpack.c.b16 %v826, %v824
        %v969 = vpack.c.b16 %v829, %v827
        %v970 = vpack.c.b16 %v830, %v828
        %v971 = vpack.c.b16 %v833, %v831
        %v972 = vpack.c.b16 %v834, %v832
        %v973 = vpack.c.b16 %v837, %v835
        %v974 = vpack.c.b16 %v838, %v836
        %v975 = vpack.c.b16 %v841, %v839
        %v976 = vpack.c.b16 %v842, %v840
        %v977 = vpack.c.b16 %v845, %v843
        %v978 = vpack.c.b16 %v846, %v844
        %v979 = vpack.c.b16 %v849, %v847
        %v980 = vpack.c.b16 %v850, %v848
        %v981 = vpack.c.b16 %v853, %v851
        %v982 = vpack.c.b16 %v854, %v852
        %1111 = vmatprep.subr.bf16.mxu0 %v856
        %1112 = vmatpush1.bf16.msra.mxu0 %v855
        %1113 = vmatprep.subr.bf16.mxu0 %v858
        %1114 = vmatpush1.bf16.msra.mxu0 %v857
        %1115 = vmatprep.subr.bf16.mxu0 %v860
        %1116 = vmatpush1.bf16.msra.mxu0 %v859
        %1117 = vmatprep.subr.bf16.mxu0 %v862
        %1118 = vmatpush1.bf16.msra.mxu0 %v861
        %1119 = vmatprep.subr.bf16.mxu0 %v864
        %1120 = vmatpush1.bf16.msra.mxu0 %v863
        %1121 = vmatprep.subr.bf16.mxu0 %v866
        %1122 = vmatpush1.bf16.msra.mxu0 %v865
        %1123 = vmatprep.subr.bf16.mxu0 %v868
        %1124 = vmatpush1.bf16.msra.mxu0 %v867
        %1125 = vmatprep.subr.bf16.mxu0 %v870
        %1126 = vmatpush1.bf16.msra.mxu0 %v869
        %1127 = vmatprep.subr.bf16.mxu0 %v872
        %1128 = vmatpush1.bf16.msra.mxu0 %v871
        %1129 = vmatprep.subr.bf16.mxu0 %v874
        %1130 = vmatpush1.bf16.msra.mxu0 %v873
        %1131 = vmatprep.subr.bf16.mxu0 %v876
        %1132 = vmatpush1.bf16.msra.mxu0 %v875
        %1133 = vmatprep.subr.bf16.mxu0 %v878
        %1134 = vmatpush1.bf16.msra.mxu0 %v877
        %1135 = vmatprep.subr.bf16.mxu0 %v880
        %1136 = vmatpush1.bf16.msra.mxu0 %v879
        %1137 = vmatprep.subr.bf16.mxu0 %v882
        %1138 = vmatpush1.bf16.msra.mxu0 %v881
        %1139 = vmatprep.subr.bf16.mxu0 %v884
        %1140 = vmatpush1.bf16.msra.mxu0 %v883
        %1141 = vmatprep.subr.bf16.mxu0 %v886
        %1142 = vmatpush1.bf16.msra.mxu0 %v885
        %1143 = vmatprep.mubr.bf16.mxu0 %v444
        %1144 = vmatmul.mubr.bf16.gmra.mrb[0].mxu0 %v436
        %v1145 = vpop.f32.mrb[0].mxu0
        %v1146 = vadd.f32 0.0, %v1145
        %v1147 = vpop.f32.mrb[0].mxu0
        %v1148 = vadd.f32 0.0, %v1147
        %v1149 = vpop.f32.mrb[0].mxu0
        %v1150 = vpop.f32.mrb[0].mxu0
        %1151 = vdwg.mxu0
        %1152 = vmatprep.subr.bf16.mxu0 %v888
        %1153 = vmatpush1.bf16.msra.mxu0 %v887
        %1154 = vmatprep.subr.bf16.mxu0 %v890
        %1155 = vmatpush1.bf16.msra.mxu0 %v889
        %1156 = vmatprep.subr.bf16.mxu0 %v892
        %1157 = vmatpush1.bf16.msra.mxu0 %v891
        %1158 = vmatprep.subr.bf16.mxu0 %v894
        %1159 = vmatpush1.bf16.msra.mxu0 %v893
        %1160 = vmatprep.subr.bf16.mxu0 %v896
        %1161 = vmatpush1.bf16.msra.mxu0 %v895
        %1162 = vmatprep.subr.bf16.mxu0 %v898
        %1163 = vmatpush1.bf16.msra.mxu0 %v897
        %1164 = vmatprep.subr.bf16.mxu0 %v900
        %1165 = vmatpush1.bf16.msra.mxu0 %v899
        %1166 = vmatprep.subr.bf16.mxu0 %v902
        %1167 = vmatpush1.bf16.msra.mxu0 %v901
        %1168 = vmatprep.subr.bf16.mxu0 %v904
        %1169 = vmatpush1.bf16.msra.mxu0 %v903
        %1170 = vmatprep.subr.bf16.mxu0 %v906
        %1171 = vmatpush1.bf16.msra.mxu0 %v905
        %1172 = vmatprep.subr.bf16.mxu0 %v908
        %1173 = vmatpush1.bf16.msra.mxu0 %v907
        %1174 = vmatprep.subr.bf16.mxu0 %v910
        %1175 = vmatpush1.bf16.msra.mxu0 %v909
        %1176 = vmatprep.subr.bf16.mxu0 %v912
        %1177 = vmatpush1.bf16.msra.mxu0 %v911
        %1178 = vmatprep.subr.bf16.mxu0 %v914
        %1179 = vmatpush1.bf16.msra.mxu0 %v913
        %1180 = vmatprep.subr.bf16.mxu0 %v916
        %1181 = vmatpush1.bf16.msra.mxu0 %v915
        %1182 = vmatprep.subr.bf16.mxu0 %v918
        %1183 = vmatpush1.bf16.msra.mxu0 %v917
        %1184 = vmatprep.mubr.bf16.mxu0 %v445
        %1185 = vmatmul.mubr.bf16.gmra.mrb[0].mxu0 %v443
        %v1186 = vpop.f32.mrb[0].mxu0
        %v1187 = vadd.f32 %v1146, %v1186
        %v1188 = vpop.f32.mrb[0].mxu0
        %v1189 = vadd.f32 %v1148, %v1188
        %v1190 = vpop.f32.mrb[0].mxu0
        %v1191 = vpop.f32.mrb[0].mxu0
        %1192 = vdwg.mxu0
        %1193 = vmatprep.subr.bf16.mxu0 %v920
        %1194 = vmatpush1.bf16.msra.mxu0 %v919
        %1195 = vmatprep.subr.bf16.mxu0 %v922
        %1196 = vmatpush1.bf16.msra.mxu0 %v921
        %1197 = vmatprep.subr.bf16.mxu0 %v924
        %1198 = vmatpush1.bf16.msra.mxu0 %v923
        %1199 = vmatprep.subr.bf16.mxu0 %v926
        %1200 = vmatpush1.bf16.msra.mxu0 %v925
        %1201 = vmatprep.subr.bf16.mxu0 %v928
        %1202 = vmatpush1.bf16.msra.mxu0 %v927
        %1203 = vmatprep.subr.bf16.mxu0 %v930
        %1204 = vmatpush1.bf16.msra.mxu0 %v929
        %1205 = vmatprep.subr.bf16.mxu0 %v932
        %1206 = vmatpush1.bf16.msra.mxu0 %v931
        %1207 = vmatprep.subr.bf16.mxu0 %v934
        %1208 = vmatpush1.bf16.msra.mxu0 %v933
        %1209 = vmatprep.subr.bf16.mxu0 %v936
        %1210 = vmatpush1.bf16.msra.mxu0 %v935
        %1211 = vmatprep.subr.bf16.mxu0 %v938
        %1212 = vmatpush1.bf16.msra.mxu0 %v937
        %1213 = vmatprep.subr.bf16.mxu0 %v940
        %1214 = vmatpush1.bf16.msra.mxu0 %v939
        %1215 = vmatprep.subr.bf16.mxu0 %v942
        %1216 = vmatpush1.bf16.msra.mxu0 %v941
        %1217 = vmatprep.subr.bf16.mxu0 %v944
        %1218 = vmatpush1.bf16.msra.mxu0 %v943
        %1219 = vmatprep.subr.bf16.mxu0 %v946
        %1220 = vmatpush1.bf16.msra.mxu0 %v945
        %1221 = vmatprep.subr.bf16.mxu0 %v948
        %1222 = vmatpush1.bf16.msra.mxu0 %v947
        %1223 = vmatprep.subr.bf16.mxu0 %v950
        %1224 = vmatpush1.bf16.msra.mxu0 %v949
        %1225 = vmatprep.mubr.bf16.mxu0 %v461
        %1226 = vmatmul.mubr.bf16.gmra.mrb[0].mxu0 %v453
        %v1227 = vpop.f32.mrb[0].mxu0
        %v1228 = vadd.f32 %v1187, %v1227
        %v1229 = vpop.f32.mrb[0].mxu0
        %v1230 = vadd.f32 %v1189, %v1229
        %v1231 = vpop.f32.mrb[0].mxu0
        %v1232 = vpop.f32.mrb[0].mxu0
        %1233 = vdwg.mxu0
        %1234 = vmatprep.subr.bf16.mxu0 %v952
        %1235 = vmatpush1.bf16.msra.mxu0 %v951
        %1236 = vmatprep.subr.bf16.mxu0 %v954
        %1237 = vmatpush1.bf16.msra.mxu0 %v953
        %1238 = vmatprep.subr.bf16.mxu0 %v956
        %1239 = vmatpush1.bf16.msra.mxu0 %v955
        %1240 = vmatprep.subr.bf16.mxu0 %v958
        %1241 = vmatpush1.bf16.msra.mxu0 %v957
        %1242 = vmatprep.subr.bf16.mxu0 %v960
        %1243 = vmatpush1.bf16.msra.mxu0 %v959
        %1244 = vmatprep.subr.bf16.mxu0 %v962
        %1245 = vmatpush1.bf16.msra.mxu0 %v961
        %1246 = vmatprep.subr.bf16.mxu0 %v964
        %1247 = vmatpush1.bf16.msra.mxu0 %v963
        %1248 = vmatprep.subr.bf16.mxu0 %v966
        %1249 = vmatpush1.bf16.msra.mxu0 %v965
        %1250 = vmatprep.subr.bf16.mxu0 %v968
        %1251 = vmatpush1.bf16.msra.mxu0 %v967
        %1252 = vmatprep.subr.bf16.mxu0 %v970
        %1253 = vmatpush1.bf16.msra.mxu0 %v969
        %1254 = vmatprep.subr.bf16.mxu0 %v972
        %1255 = vmatpush1.bf16.msra.mxu0 %v971
        %1256 = vmatprep.subr.bf16.mxu0 %v974
        %1257 = vmatpush1.bf16.msra.mxu0 %v973
        %1258 = vmatprep.subr.bf16.mxu0 %v976
        %1259 = vmatpush1.bf16.msra.mxu0 %v975
        %1260 = vmatprep.subr.bf16.mxu0 %v978
        %1261 = vmatpush1.bf16.msra.mxu0 %v977
        %1262 = vmatprep.subr.bf16.mxu0 %v980
        %1263 = vmatpush1.bf16.msra.mxu0 %v979
        %1264 = vmatprep.subr.bf16.mxu0 %v982
        %1265 = vmatpush1.bf16.msra.mxu0 %v981
        %1266 = vmatprep.mubr.bf16.mxu0 %v462
        %1267 = vmatmul.mubr.bf16.gmra.mrb[0].mxu0 %v460
        %v1268 = vpop.f32.mrb[0].mxu0
        %v1269 = vadd.f32 %v1228, %v1268
        %v1270 = vpop.f32.mrb[0].mxu0
        %v1271 = vadd.f32 %v1230, %v1270
        %v1272 = vpop.f32.mrb[0].mxu0
        %v1273 = vpop.f32.mrb[0].mxu0
        %1274 = vdwg.mxu0
        %p1275 = scmp.eq.s32.totalorder %s30, 0
        // Predicated region
        $region45: #{tpu_custom_call.1} parent=31 // pred_check
          %p1276 = pneg %p1275
        $region46: #{tpu_custom_call.1} parent=31 // pred_check_branch
          %1278 = sbr.rel (%p1276) target = $region48
        $region47: #{tpu_custom_call.1} parent=31 // pred_region
          %1279 = vst [vmem:[%s291] sm:$0xff] 0.0
        $region48: #{tpu_custom_call.1} parent=31 // pred_fallthru
          _
        %v1280 = vld [vmem:[%s291] sm:$0xff]
        %v1283 = vcombine.low %v1269, %v1271
        %v1285 = vadd.f32 %v1280, %v1283
        %1286 = vst [vmem:[%s291] sm:$0xff] %v1285
        %p1287 = scmp.eq.s32.totalorder %s30, 8
        // Predicated region
        $region49: #{tpu_custom_call.1} parent=31 // pred_check
          %p1288 = pneg %p1287
        $region50: #{tpu_custom_call.1} parent=31 // pred_check_branch
          %1290 = sbr.rel (%p1288) target = $region52
        $region51: #{tpu_custom_call.1} parent=31 // pred_region
          %v1291 = vld [vmem:[%s291] sm:$0xff]
          %v1292 = vld [vmem:[%s259] sm:$0x3]
          %v1294 = vlaneseq
          %v1295 = vshrl.u32 %v1294, 7
          %v1296 = vsub.s32 0, %v1295
          %v1297 = vrot.slane %v1292, %v1296
          %v1298 = vlaneseq
          %v1299 = vshrl.u32 %v1298, 7
          %v1300 = vsub.s32 1, %v1299
          %v1301 = vrot.slane %v1292, %v1300
          %v1302 = vcombine.low %v1297, %v1301
          %v1304 = vadd.f32 %v1291, %v1302
          %1305 = vst [vmem:[%s291] sm:$0xff] %v1304
        $region52: #{tpu_custom_call.1} parent=31 // pred_fallthru
          _
        %s1306 = sand.u32 %s134, 1
        %s1307 = scalar_lea.sflag [#allocation4], %s1306
        %s1308 = sand.u32 %s134, 1
        %s1309 = smul.addr %s1308, 8
        %s1310 = scalar_lea.vmem [#allocation8], %s1309
        // Predicated region
        $region53: #{tpu_custom_call.1} parent=31 // pred_check
          %p1311 = pneg %p144
        $region54: #{tpu_custom_call.1} parent=31 // pred_check_branch
          %1313 = sbr.rel (%p1311) target = $region56
        $region55: #{tpu_custom_call.1} parent=31 // pred_region
          %s1314 = smul.u32 2, %s29
          %s1316 = ssub.s32 128, 128
          %1317 = vsyncadd %s1307, %s1316
          %s1318 = smul.addr %s28, 6
          %s1319 = sadd.s32 %s1314, %s1318
          %s1320 = smul.addr %s1319, 64
          %s1321 = scalar_lea.hbm %s3, %s1320
          %s1323 = sshll.u32 %s1310, 4
          %s1324 = int_to_ptr.vmem [resolvable:$true] %s1323
          %1326 = dma.vmem_to_hbm [thread:$0]  %s1324, 128, %s1321, %s1307
        $region56: #{tpu_custom_call.1} parent=31 // pred_fallthru
          _
      $region32: #{tpu_custom_call.1} parent=5 // pred_fallthru
        _
      %p1327 = scmp.le.s32.totalorder 2, %s18
      // Predicated region
      $region57: #{tpu_custom_call.1} parent=5 // pred_check
        %p1328 = pneg %p1327
      $region58: #{tpu_custom_call.1} parent=5 // pred_check_branch
        %1330 = sbr.rel (%p1328) target = $region60
      $region59: #{tpu_custom_call.1} parent=5 // pred_region
        %s1331 = ssub.s32 %s18, 2
        // Predicated region
        $region61: #{tpu_custom_call.1} parent=59 // pred_check
          %p1332 = pneg %p150
        $region62: #{tpu_custom_call.1} parent=59 // pred_check_branch
          %1334 = sbr.rel (%p1332) target = $region64
        $region63: #{tpu_custom_call.1} parent=59 // pred_region
          %s1335 = sand.u32 %s135, 1
          %s1336 = scalar_lea.sflag [#allocation4], %s1335
          %s1337 = sand.u32 %s135, 1
          %s1338 = smul.addr %s1337, 8
          %s1339 = scalar_lea.vmem [#allocation8], %s1338
          %1340 = dma.done %s1336, 128
        $region64: #{tpu_custom_call.1} parent=59 // pred_fallthru
          _
      $region60: #{tpu_custom_call.1} parent=5 // pred_fallthru
        _
    $region6: #{tpu_custom_call.1} parent=1 // loop_footer
      %s22 = sadd.s32 1, %s18
    $region7: #{tpu_custom_call.1} parent=1 // loop_footer_branch
      %17 = sbr.rel target = $region3
    $region8: #{tpu_custom_call.1} parent=1 // loop_exit
      _
    %1341 = vsyncpa [#allocation3], 1
    %s1342 = scalar_lea.sflag [#allocation3], 1
    %1343 = vsyncpa %s1342, 1
    %1344 = vsyncpa [#allocation6], 1
    %s1345 = scalar_lea.sflag [#allocation6], 1
    %1346 = vsyncpa %s1345, 1
    %1347 = vsyncpa [#allocation4], 1
    %s1348 = scalar_lea.sflag [#allocation4], 1
    %1349 = vsyncpa %s1348, 1

</llo_original>
